<compile_context>
chip_gen: v7x
topology: tpu7x:2x2x1
jax: 0.10.0
libtpu: 0.0.40
codegen_flags: <defaults>
</compile_context>

<pallas_src>
import jax
import jax.numpy as jnp
from jax.experimental import pallas as pl
from jax.experimental.pallas import tpu as pltpu

_LANE = 128


def _sublane_align(dtype) -> int:
    size = jnp.dtype(dtype).itemsize
    if size >= 4:
        return 8
    if size == 2:
        return 16
    return 32


def _largest_aligned_divisor(total: int, align: int, cap: int):
    """Largest d <= cap with d % align == 0 and total % d == 0, else None."""
    if total % align != 0:
        return None
    best = None
    f = 1
    while f * align <= min(total, cap):
        d = f * align
        if total % d == 0:
            best = d
        f += 1
    return best


# ---------------------------------------------------------------------------
# Kernels
# ---------------------------------------------------------------------------
def _rs_fold_all_kernel(x_ref, o_ref):
    """All buckets in one input block: single pass, no scratch, no pl.when.

    x_ref : (num_buckets, tb, td)
    o_ref : (tb, td)
    """
    o_ref[...] = jnp.sum(x_ref[...].astype(jnp.float32), axis=0).astype(o_ref.dtype)


def _rs_acc_into_out_kernel(x_ref, o_ref):
    """Partial bucket fold, f32 output: accumulate directly into the resident
    output block (no scratch, no epilogue copy).

    x_ref : (kb, tb, td)
    o_ref : (tb, td) float32, resident across the reduction grid axis
    """
    k = pl.program_id(2)
    partial = jnp.sum(x_ref[...].astype(jnp.float32), axis=0)

    @pl.when(k == 0)
    def _():
        o_ref[...] = partial

    @pl.when(k != 0)
    def _():
        o_ref[...] += partial


def _rs_acc_scratch_kernel(x_ref, o_ref, acc_ref):
    """Partial bucket fold, sub-32-bit output: keep an f32 VMEM accumulator.

    x_ref   : (kb, tb, td)
    o_ref   : (tb, td)   output dtype (e.g. bf16)
    acc_ref : (tb, td)   float32 scratch
    """
    k = pl.program_id(2)
    partial = jnp.sum(x_ref[...].astype(jnp.float32), axis=0)

    @pl.when(k == 0)
    def _():
        acc_ref[...] = partial

    @pl.when(k != 0)
    def _():
        acc_ref[...] += partial

    @pl.when(k == pl.num_programs(2) - 1)
    def _():
        o_ref[...] = acc_ref[...].astype(o_ref.dtype)


# ---------------------------------------------------------------------------
# Wrapper
# ---------------------------------------------------------------------------
def pooled_embeddings_reduce_scatter(local_embs, num_buckets, input_splits=None,
                                     *, tb=None, td=None, kb=None,
                                     vmem_budget_bytes=16 * (1 << 20)):
    """Single-device equivalent of PooledEmbeddingsReduceScatter.forward().

    Args:
      local_embs:  [num_buckets * batch_size, dimension] array.
      num_buckets: world size / number of bucket slices along dim 0.
      input_splits: optional per-bucket row splits. Only the equal-split
        (reduce_scatter_base) path is implemented in the kernel.
      tb, td, kb: optional tile overrides (batch tile, lane tile, buckets
        folded per grid step).
      vmem_budget_bytes: working-set budget used for automatic tile sizing.

    Returns:
      [batch_size, dimension] array = sum over buckets, dtype of local_embs.
    """
    total_rows, dim = local_embs.shape

    if input_splits is not None and len(set(input_splits)) > 1:
        # TODO(synk): reduce_scatter_v (unequal per-rank splits) has no clean
        # single-device Pallas equivalent; only the equal-split path is lowered.
        raise NotImplementedError("unequal input_splits not supported")

    assert total_rows % num_buckets == 0
    batch_size = total_rows // num_buckets

    in_dtype = local_embs.dtype
    out_dtype = local_embs.dtype
    in_sz = jnp.dtype(in_dtype).itemsize
    out_sz = jnp.dtype(out_dtype).itemsize
    sub_align = _sublane_align(in_dtype)
    out_is_f32 = jnp.dtype(out_dtype) == jnp.dtype(jnp.float32)

    # View the flat [W*B, D] tensor as [W, B, D] for bucket-wise tiling.
    x = local_embs.reshape(num_buckets, batch_size, dim)

    # ---- lane tile (td): lane-dense, multiple of 128, capped at 2048 lanes.
    td_given, tb_given = td, tb
    if td is None:
        td = _largest_aligned_divisor(dim, _LANE, min(dim, 2048)) or dim
    else:
        assert dim % td == 0, "td must divide dimension"
        assert td == dim or td % _LANE == 0, "td must be a multiple of 128 (or full dim)"

    # ---- batch tile (tb): multiple of the dtype's sublane pack, capped so one
    # tile (double-buffered input @ kb=1 + output + f32 acc) fits the budget.
    if tb is None:
        per_row_bytes = td * (2 * in_sz + 2 * out_sz + 4)
        tb_cap = max(sub_align, vmem_budget_bytes // max(per_row_bytes, 1))
        tb = (_largest_aligned_divisor(batch_size, sub_align,
                                       min(batch_size, 512, tb_cap))
              or batch_size)
    else:
        assert batch_size % tb == 0, "tb must divide batch_size"
        assert tb == batch_size or tb % sub_align == 0, (
            f"tb must be a multiple of {sub_align} for dtype {in_dtype} (or full batch)")

    # ---- ensure >= 2 lane-aligned output tiles when possible (v7x: 2 TCs/chip),
    # but only if each half stays lane-dense (>= 512 lanes).
    if tb_given is None and td_given is None:
        if (batch_size // tb) * (dim // td) == 1:
            half = _largest_aligned_divisor(dim, _LANE, td // 2)
            if half is not None and half >= 512:
                td = half

    # ---- buckets folded per grid step (kb): as many as fit the VMEM budget.
    def _vmem_bytes(kb_):
        need_scratch = (kb_ != num_buckets) and (not out_is_f32)
        inp = 2 * kb_ * tb * td * in_sz          # double-buffered input block
        out = 2 * tb * td * out_sz               # output block (conservative)
        acc = tb * td * 4 if need_scratch else 0
        return inp + out + acc

    if kb is None:
        kb = 1
        for d in sorted((d for d in range(1, num_buckets + 1)
                         if num_buckets % d == 0), reverse=True):
            if _vmem_bytes(d) <= vmem_budget_bytes:
                kb = d
                break
    else:
        assert num_buckets % kb == 0, "kb must divide num_buckets"

    est_bytes = _vmem_bytes(kb)
    # Cap at 64 MiB (v7x physical VMEM); leave generous headroom below that.
    vmem_limit = int(min(64 << 20, max(16 << 20, int(est_bytes * 2) + (2 << 20))))

    # Advisory cost: pure HBM-bandwidth-bound reduction.
    cost = pl.CostEstimate(
        flops=max(0, num_buckets - 1) * batch_size * dim,
        transcendentals=0,
        bytes_accessed=total_rows * dim * in_sz + batch_size * dim * out_sz,
    )

    out_shape = jax.ShapeDtypeStruct((batch_size, dim), out_dtype)

    if kb == num_buckets:
        # Fully folded: no reduction grid axis, no scratch, no pl.when.
        grid = (batch_size // tb, dim // td)
        grid_spec = pltpu.PrefetchScalarGridSpec(
            num_scalar_prefetch=0,
            grid=grid,
            in_specs=[pl.BlockSpec((num_buckets, tb, td), lambda i, j: (0, i, j))],
            out_specs=pl.BlockSpec((tb, td), lambda i, j: (i, j)),
        )
        kernel = _rs_fold_all_kernel
        dim_sem = ("parallel", "parallel")
    else:
        grid = (batch_size // tb, dim // td, num_buckets // kb)
        in_specs = [pl.BlockSpec((kb, tb, td), lambda i, j, k: (k, i, j))]
        out_specs = pl.BlockSpec((tb, td), lambda i, j, k: (i, j))
        if out_is_f32:
            kernel = _rs_acc_into_out_kernel
            scratch = []
        else:
            kernel = _rs_acc_scratch_kernel
            scratch = [pltpu.VMEM((tb, td), jnp.float32)]
        grid_spec = pltpu.PrefetchScalarGridSpec(
            num_scalar_prefetch=0,
            grid=grid,
            in_specs=in_specs,
            out_specs=out_specs,
            scratch_shapes=scratch,
        )
        dim_sem = ("parallel", "parallel", "arbitrary")

    out = pl.pallas_call(
        kernel,
        out_shape=out_shape,
        grid_spec=grid_spec,
        compiler_params=pltpu.CompilerParams(
            dimension_semantics=dim_sem,
            vmem_limit_bytes=vmem_limit),
        cost_estimate=cost,
    )(x)
    return out


if __name__ == "__main__":
    key = jax.random.PRNGKey(0)
    k1, k2 = jax.random.split(key)

    # Case 1: fully-folded path (all buckets in one input block), f32.
    W, B, D = 2, 8, 128
    x1 = jax.random.normal(k1, (W * B, D), dtype=jnp.float32)
    out1 = jax.block_until_ready(pooled_embeddings_reduce_scatter(x1, W))
    ref1 = x1.reshape(W, B, D).sum(axis=0)
    assert out1.shape == (B, D) and out1.dtype == x1.dtype
    assert jnp.allclose(out1, ref1, atol=1e-5, rtol=1e-5)

    # Case 2: partial-fold path, f32 output accumulated in place (kb=1).
    W2, B2, D2 = 4, 16, 256
    x2 = jax.random.normal(k2, (W2 * B2, D2), dtype=jnp.float32)
    out2 = jax.block_until_ready(
        pooled_embeddings_reduce_scatter(x2, W2, kb=1))
    ref2 = x2.reshape(W2, B2, D2).sum(axis=0)
    assert out2.shape == (B2, D2) and out2.dtype == x2.dtype
    assert jnp.allclose(out2, ref2, atol=1e-5, rtol=1e-5)

    # Case 3: partial-fold path with f32 scratch accumulator for bf16 (kb=2).
    x3 = x2.astype(jnp.bfloat16)
    out3 = jax.block_until_ready(
        pooled_embeddings_reduce_scatter(x3, W2, kb=2))
    ref3 = (x3.reshape(W2, B2, D2).astype(jnp.float32)
            .sum(axis=0).astype(jnp.bfloat16))
    assert out3.shape == (B2, D2) and out3.dtype == jnp.bfloat16
    assert jnp.allclose(out3.astype(jnp.float32), ref3.astype(jnp.float32),
                        atol=2e-2, rtol=2e-2)

    print("KERNEL_OK")
</pallas_src>

<mosaic_0001>
module attributes {stable_mosaic.version = 11 : i64} {
  func.func @_rs_fold_all_kernel(%arg0: i32, %arg1: i32, %arg2: memref<2x8x128xf32, #tpu.memory_space<vmem>>, %arg3: memref<8x128xf32, #tpu.memory_space<vmem>>) attributes {dimension_semantics = [#tpu.dimension_semantics<parallel>, #tpu.dimension_semantics<parallel>], iteration_bounds = array<i64: 1, 1>, scalar_prefetch = 0 : i64, scratch_operands = 0 : i64, tpu.core_type = #tpu.core_type<tc>, window_params = [{transform_indices = @transform_0, window_bounds = array<i64: 2, 8, 128>}, {transform_indices = @transform_1, window_bounds = array<i64: 8, 128>}]} {
    %c0 = arith.constant 0 : index
    %c0_0 = arith.constant 0 : index
    %c0_1 = arith.constant 0 : index
    %0 = vector.load %arg2[%c0, %c0_0, %c0_1] : memref<2x8x128xf32, #tpu.memory_space<vmem>>, vector<2x8x128xf32>
    %cst = arith.constant dense<0.000000e+00> : vector<8x128xf32>
    %1 = vector.multi_reduction <add>, %0, %cst [0] : vector<2x8x128xf32> to vector<8x128xf32>
    %c0_2 = arith.constant 0 : index
    %c0_3 = arith.constant 0 : index
    %2 = vector.load %arg3[%c0_2, %c0_3] : memref<8x128xf32, #tpu.memory_space<vmem>>, vector<8x128xf32>
    tpu.vector_store %arg3[%c0_2, %c0_3], %1 {strides = array<i32>} : memref<8x128xf32, #tpu.memory_space<vmem>>, vector<8x128xf32>,
    return
  }
  func.func @transform_0(%arg0: i32, %arg1: i32) -> (i32, i32, i32) {
    %c0_i32 = arith.constant 0 : i32
    %c0_i32_0 = arith.constant 0 : i32
    return %c0_i32, %arg0, %arg1 : i32, i32, i32
  }
  func.func @transform_1(%arg0: i32, %arg1: i32) -> (i32, i32) {
    %c0_i32 = arith.constant 0 : i32
    return %arg0, %arg1 : i32, i32
  }
}

</mosaic_0001>

<llo_original>
// kernel: tpu_custom_call.1
$region0: #{tpu_custom_call.1}
  #allocation0 [shape = 'u32[]', space=smem, size = 0x4, offset = 0x4, fixed_abs, tag = 'smem constant byte address 0x4 - core index']
  #allocation1 [shape = 'u32[144,128]{1,0:T(1,128)}', space=vmem, size = 0x12000, scoped, tag = 'internal scratch']
  %s0 = inlined_call_operand.hbm [shape: f32[2,8,128], index: 0, kind: input, shape index: {}]
  %s1 = inlined_call_operand.hbm [shape: f32[8,128], index: 1, kind: output, shape index: {}]
  %s2 = sld [smem:[#allocation0]]
  $region18: #{tpu_custom_call.1} parent=0
    _
  %s4 = ssub.s32 1, %s2
  %s5 = scalar_select 0, %s4, %s2
  $region1: #{tpu_custom_call.1} parent=0
    #allocation2 [shape = 'u8[8192]{0}', space=vmem, size = 0x2000, scoped, tag = 'input window, operand 0, single buffered']
    #allocation3 [shape = 's32[1]{0}', space=sflag, size = 0x4, scoped, tag = 'scoped memory for tpu_custom_call.1']
    #allocation4 [shape = 's32[1]{0}', space=sflag, size = 0x4, scoped, tag = 'scoped memory for tpu_custom_call.1']
    #allocation5 [shape = 'u8[4096]{0}', space=vmem, size = 0x1000, scoped, tag = 'output window, operand 0, single buffered']
    %6 = vsyncpa [#allocation3], 0
    %7 = vsyncpa [#allocation4], 0
    // Predicated region
    $region2: #{tpu_custom_call.1} parent=1 // pred_check
      _
    $region3: #{tpu_custom_call.1} parent=1 // pred_check_branch
      %9 = sbr.rel (0) target = $region5
    $region4: #{tpu_custom_call.1} parent=1 // pred_region
      %s11 = ssub.s32 256, 256
      %12 = vsyncadd [#allocation3], %s11
      %s13 = sshll.u32 [#allocation2], 4
      %s14 = int_to_ptr.vmem [resolvable:$true] %s13
      %19 = dma.hbm_to_vmem [thread:$0]  %s0, 256, %s14, [#allocation3], 128, 128, 8
    $region5: #{tpu_custom_call.1} parent=1 // pred_fallthru
      _
    // Predicated region
    $region6: #{tpu_custom_call.1} parent=1 // pred_check
      _
    $region7: #{tpu_custom_call.1} parent=1 // pred_check_branch
      %21 = sbr.rel (0) target = $region9
    $region8: #{tpu_custom_call.1} parent=1 // pred_region
      %22 = dma.done [#allocation3], 256
    $region9: #{tpu_custom_call.1} parent=1 // pred_fallthru
      _
    %v23 = vld [vmem:[#allocation2] sm:$0xff]
    %v24 = vld [vmem:[#allocation2 + $0x8] sm:$0xff]
    %v25 = vadd.f32 %v23, %v24
    %26 = vst [vmem:[#allocation5] sm:$0xff] %v25
    // Predicated region
    $region10: #{tpu_custom_call.1} parent=1 // pred_check
      _
    $region11: #{tpu_custom_call.1} parent=1 // pred_check_branch
      %28 = sbr.rel (0) target = $region13
    $region12: #{tpu_custom_call.1} parent=1 // pred_region
      %s30 = ssub.s32 128, 128
      %31 = vsyncadd [#allocation4], %s30
      %s33 = sshll.u32 [#allocation5], 4
      %s34 = int_to_ptr.vmem [resolvable:$true] %s33
      %36 = dma.vmem_to_hbm [thread:$0]  %s34, 128, %s1, [#allocation4]
    $region13: #{tpu_custom_call.1} parent=1 // pred_fallthru
      _
    // Predicated region
    $region14: #{tpu_custom_call.1} parent=1 // pred_check
      _
    $region15: #{tpu_custom_call.1} parent=1 // pred_check_branch
      %38 = sbr.rel (0) target = $region17
    $region16: #{tpu_custom_call.1} parent=1 // pred_region
      %39 = dma.done [#allocation4], 128
    $region17: #{tpu_custom_call.1} parent=1 // pred_fallthru
      _
    %40 = vsyncpa [#allocation3], 1
    %41 = vsyncpa [#allocation4], 1

</llo_original>
